<compile_context>
chip_gen: v6e
topology: v6e:2x2x1
jax: 0.10.0
libtpu: 0.0.40
codegen_flags: <defaults>
</compile_context>

<pallas_src>
import jax
import jax.numpy as jnp
from jax.experimental import pallas as pl
from jax.experimental.pallas import tpu as pltpu  # noqa: F401  (TPU backend import)


# -----------------------------------------------------------------------------
# Fused Pallas kernel: conv3x3 (im2col) + bias + ReLU + flatten + fc
# -----------------------------------------------------------------------------
def _convnet_fused_kernel(pt_ref, w2_ref, b_ref, wfc_ref, bfc_ref,
                          conv_ref, relu_flat_ref, y_ref):
    # pt_ref       : (Kp, N*HW)     im2col patches (K padded 36->40), batch on lanes
    # w2_ref       : (Cout, Kp)     conv weight, PyTorch (Cout,Cin,3,3) flat + zero pad
    # b_ref        : (Cout, 1)      conv bias (broadcast over lanes)
    # wfc_ref      : (Cout*HW, Dout) fc weight transposed (rows = c*HW + h*W + w)
    # bfc_ref      : (1, Dout)
    # conv_ref     : (N, Cout, HW)  conv hook output (lane-dense, HW=256)
    # relu_flat_ref: (N, Cout*HW)   relu / flatten hook output (lane-dense, 2048)
    # y_ref        : (N, Dout)
    N, C, HW = conv_ref.shape

    # --- conv1 as ONE im2col matmul (whole batch on lanes) + fused bias & ReLU ---
    conv_all = jnp.dot(w2_ref[...], pt_ref[...],
                       preferred_element_type=jnp.float32) + b_ref[...]   # (C, N*HW)
    relu_all = jnp.maximum(conv_all, 0.0)

    # --- conv hook output: 2 unmasked 256-lane block stores -----------------------
    for n in range(N):  # static; lane slices at multiples of 256 -> no relayout
        conv_ref[n] = conv_all[:, n * HW:(n + 1) * HW]

    # --- build FC lhs (N, C*HW) in PyTorch NCHW-flatten order from the in-register
    #     relu value (no dependency on the hook-output stores) ---------------------
    sample_rows = []
    for n in range(N):                                   # static, N small
        r_n = relu_all[:, n * HW:(n + 1) * HW]           # (C, HW) lane slice
        sample_rows.append(
            jnp.concatenate([r_n[c:c + 1, :] for c in range(C)], axis=1))  # (1, C*HW)
    relu_flat = jnp.concatenate(sample_rows, axis=0)     # (N, C*HW)

    # relu / flatten hook output: single unmasked 2048-lane store
    relu_flat_ref[...] = relu_flat

    # --- fc: ONE chained K = C*HW matmul for the whole batch ----------------------
    y = jnp.dot(relu_flat, wfc_ref[...],
                preferred_element_type=jnp.float32) + bfc_ref[...]        # (N, Dout)
    y_ref[...] = y                                       # single block store


# -----------------------------------------------------------------------------
# Wrapper: one jitted program (small im2col / weight relayout + single pallas_call)
# -----------------------------------------------------------------------------
@jax.jit
def _fused_forward(x_nchw, conv_w, conv_b, fc_w, fc_b):
    N, Cin, H, W = x_nchw.shape
    Cout = conv_w.shape[0]
    Dout = fc_w.shape[0]
    HW = H * W
    K = Cin * 9
    Kp = ((K + 7) // 8) * 8        # 36 -> 40: clean sublane / MXU-K alignment

    # im2col: transpose the SMALL padded input first (Cin leading), so the 9 taps
    # are built directly in (Cin, 9, N, H, W) order and the final reshape is a
    # free contiguous view.  k ordering = cin*9 + dh*3 + dw, column = n*HW + h*W + w.
    xp = jnp.pad(x_nchw, ((0, 0), (0, 0), (1, 1), (1, 1)))        # (N, Cin, H+2, W+2)
    xp_t = jnp.transpose(xp, (1, 0, 2, 3))                        # (Cin, N, H+2, W+2)
    cols = [xp_t[:, :, dh:dh + H, dw:dw + W] for dh in range(3) for dw in range(3)]
    patches = jnp.stack(cols, axis=1)                             # (Cin, 9, N, H, W)
    patches = patches.reshape(K, N * HW)                          # contiguous view
    patches = jnp.pad(patches, ((0, Kp - K), (0, 0)))             # zero-pad K rows

    w2 = jnp.pad(conv_w.reshape(Cout, K), ((0, 0), (0, Kp - K)))  # zero-pad K cols
    b2 = conv_b.reshape(Cout, 1)
    wfc = jnp.transpose(fc_w)                                     # (Cout*HW, Dout)
    bfc = fc_b.reshape(1, Dout)

    # No grid / BlockSpecs: whole operands (<300 KB) live in VMEM for the single
    # kernel invocation; any pipelining would only add per-step overhead here.
    conv3, relu_flat, y = pl.pallas_call(
        _convnet_fused_kernel,
        out_shape=(
            jax.ShapeDtypeStruct((N, Cout, HW), jnp.float32),
            jax.ShapeDtypeStruct((N, Cout * HW), jnp.float32),
            jax.ShapeDtypeStruct((N, Dout), jnp.float32),
        ),
    )(patches, w2, b2, wfc, bfc)

    # Hook-facing layouts (contiguous reshapes -> free views in XLA).
    conv_nchw = conv3.reshape(N, Cout, H, W)
    relu_nchw = relu_flat.reshape(N, Cout, H, W)
    flat = relu_flat                                              # (N, Cout*HW)
    return conv_nchw, relu_nchw, flat, y


# -----------------------------------------------------------------------------
# ModelAnalyzer equivalent
# -----------------------------------------------------------------------------
def _squeeze0(a):
    # torch.Tensor.squeeze(0): only drops dim 0 if it has size 1.
    return a[0] if (a.ndim > 0 and a.shape[0] == 1) else a


class SmallConvNet:
    """The wrapped model: conv1 -> relu -> flatten -> fc."""

    def __init__(self, cin=4, cout=8, hw=16, num_out=16, seed=42):
        k = jax.random.PRNGKey(seed)
        k1, k2, k3, k4 = jax.random.split(k, 4)
        self.params = {
            "conv1.weight": 0.05 * jax.random.normal(k1, (cout, cin, 3, 3), jnp.float32),
            "conv1.bias":   0.05 * jax.random.normal(k2, (cout,), jnp.float32),
            "fc.weight":    0.02 * jax.random.normal(k3, (num_out, cout * hw * hw), jnp.float32),
            "fc.bias":      0.02 * jax.random.normal(k4, (num_out,), jnp.float32),
        }

    def forward(self, x, hook=None):
        p = self.params
        conv_a, relu_a, flat_a, y = _fused_forward(
            x, p["conv1.weight"], p["conv1.bias"], p["fc.weight"], p["fc.bias"])
        if hook:
            hook("conv1", conv_a)
            hook("relu", relu_a)
            hook("flatten", flat_a)
            hook("fc", y)
            hook("", y)   # top-level module ("") hook fires on the model output
        return y


class ModelAnalyzer:
    """JAX/Pallas equivalent of deeplib.logging.model_analyzer.ModelAnalyzer."""

    def __init__(self, model: SmallConvNet):
        self.model = model
        # hook registered for every named module (incl. "" = the model itself)
        self._activations = {name: jnp.empty((0,), jnp.float32)
                             for name in ("", "conv1", "relu", "flatten", "fc")}
        # TODO(synk): `create_activation` / `Storage` wrap extra metadata in the
        # original lib; here activations are stored as raw (detached) arrays.

    def _store_output_hook(self, name, output):
        self._activations[name] = _squeeze0(jax.lax.stop_gradient(output))

    def weights(self):
        return dict(self.model.params)

    def activations(self):
        return self._activations

    def forward(self, x):
        return self.model.forward(x, hook=self._store_output_hook)

    __call__ = forward


# -----------------------------------------------------------------------------
if __name__ == "__main__":
    key = jax.random.PRNGKey(0)
    x = jax.random.normal(key, (2, 4, 16, 16), jnp.float32)   # NCHW, like PyTorch

    net = SmallConvNet(cin=4, cout=8, hw=16, num_out=16)
    analyzer = ModelAnalyzer(net)
    out = analyzer(x)
    jax.block_until_ready(out)

    acts = analyzer.activations()
    assert out.shape == (2, 16)
    assert acts["conv1"].shape == (2, 8, 16, 16)
    assert acts["relu"].shape == (2, 8, 16, 16)
    assert acts["flatten"].shape == (2, 8 * 16 * 16)
    assert acts["fc"].shape == (2, 16)
    assert acts[""].shape == (2, 16)
    jax.block_until_ready(acts["conv1"])

    # Numerical check against a plain-JAX reference of the same model.
    p = net.params
    ref_conv = jax.lax.conv_general_dilated(
        x, p["conv1.weight"], window_strides=(1, 1), padding=((1, 1), (1, 1)),
        dimension_numbers=("NCHW", "OIHW", "NCHW"),
    ) + p["conv1.bias"].reshape(1, -1, 1, 1)
    ref_relu = jnp.maximum(ref_conv, 0.0)
    ref_y = ref_relu.reshape(2, -1) @ p["fc.weight"].T + p["fc.bias"]
    assert jnp.allclose(acts["conv1"], ref_conv, atol=1e-3, rtol=1e-3)
    assert jnp.allclose(acts["relu"], ref_relu, atol=1e-3, rtol=1e-3)
    assert jnp.allclose(acts["flatten"], ref_relu.reshape(2, -1), atol=1e-3, rtol=1e-3)
    assert jnp.allclose(out, ref_y, atol=1e-3, rtol=1e-3)

    print("KERNEL_OK")
</pallas_src>

<mosaic_0001>
module attributes {stable_mosaic.version = 11 : i64} {
  func.func @_convnet_fused_kernel(%arg0: memref<40x512xf32, #tpu.memory_space<vmem>>, %arg1: memref<8x40xf32, #tpu.memory_space<vmem>>, %arg2: memref<8x1xf32, #tpu.memory_space<vmem>>, %arg3: memref<2048x16xf32, #tpu.memory_space<vmem>>, %arg4: memref<1x16xf32, #tpu.memory_space<vmem>>, %arg5: memref<2x8x256xf32, #tpu.memory_space<vmem>>, %arg6: memref<2x2048xf32, #tpu.memory_space<vmem>>, %arg7: memref<2x16xf32, #tpu.memory_space<vmem>>) attributes {dimension_semantics = [], scalar_prefetch = 0 : i64, scratch_operands = 0 : i64, tpu.core_type = #tpu.core_type<tc>} {
    %c0 = arith.constant 0 : index
    %c0_0 = arith.constant 0 : index
    %0 = vector.load %arg1[%c0, %c0_0] : memref<8x40xf32, #tpu.memory_space<vmem>>, vector<8x40xf32>
    %c0_1 = arith.constant 0 : index
    %c0_2 = arith.constant 0 : index
    %1 = vector.load %arg0[%c0_1, %c0_2] : memref<40x512xf32, #tpu.memory_space<vmem>>, vector<40x512xf32>
    %cst = arith.constant dense<0.000000e+00> : vector<8x512xf32>
    %2 = tpu.matmul %0, %1, %cst {dimension_numbers = #tpu.dot_dimension_numbers<[1], [0], [0], [1], [0, 0, 1, 1], [], []>} : vector<8x40xf32>, vector<40x512xf32>, vector<8x512xf32> -> vector<8x512xf32>
    %c0_3 = arith.constant 0 : index
    %c0_4 = arith.constant 0 : index
    %3 = vector.load %arg2[%c0_3, %c0_4] : memref<8x1xf32, #tpu.memory_space<vmem>>, vector<8x1xf32>
    %4 = vector.broadcast %3 : vector<8x1xf32> to vector<8x512xf32>
    %5 = arith.addf %2, %4 : vector<8x512xf32>
    %cst_5 = arith.constant 0.000000e+00 : f32
    %6 = vector.broadcast %cst_5 : f32 to vector<8x512xf32>
    %7 = arith.maximumf %5, %6 : vector<8x512xf32>
    %8 = vector.extract_strided_slice %5 {offsets = [0, 0], sizes = [8, 256], strides = [1, 1]} : vector<8x512xf32> to vector<8x256xf32>
    %c0_6 = arith.constant 0 : index
    %c0_7 = arith.constant 0 : index
    %c0_8 = arith.constant 0 : index
    %9 = vector.load %arg5[%c0_6, %c0_7, %c0_8] : memref<2x8x256xf32, #tpu.memory_space<vmem>>, vector<1x8x256xf32>
    %10 = vector.shape_cast %9 : vector<1x8x256xf32> to vector<8x256xf32>
    %11 = vector.shape_cast %8 : vector<8x256xf32> to vector<1x8x256xf32>
    tpu.vector_store %arg5[%c0_6, %c0_7, %c0_8], %11 {strides = array<i32>} : memref<2x8x256xf32, #tpu.memory_space<vmem>>, vector<1x8x256xf32>,
    %12 = vector.extract_strided_slice %5 {offsets = [0, 256], sizes = [8, 256], strides = [1, 1]} : vector<8x512xf32> to vector<8x256xf32>
    %c1 = arith.constant 1 : index
    %c0_9 = arith.constant 0 : index
    %c0_10 = arith.constant 0 : index
    %13 = vector.load %arg5[%c1, %c0_9, %c0_10] : memref<2x8x256xf32, #tpu.memory_space<vmem>>, vector<1x8x256xf32>
    %14 = vector.shape_cast %13 : vector<1x8x256xf32> to vector<8x256xf32>
    %15 = vector.shape_cast %12 : vector<8x256xf32> to vector<1x8x256xf32>
    tpu.vector_store %arg5[%c1, %c0_9, %c0_10], %15 {strides = array<i32>} : memref<2x8x256xf32, #tpu.memory_space<vmem>>, vector<1x8x256xf32>,
    %16 = vector.extract_strided_slice %7 {offsets = [0, 0], sizes = [8, 256], strides = [1, 1]} : vector<8x512xf32> to vector<8x256xf32>
    %17 = vector.extract_strided_slice %16 {offsets = [0, 0], sizes = [1, 256], strides = [1, 1]} : vector<8x256xf32> to vector<1x256xf32>
    %18 = vector.extract_strided_slice %16 {offsets = [1, 0], sizes = [1, 256], strides = [1, 1]} : vector<8x256xf32> to vector<1x256xf32>
    %19 = vector.extract_strided_slice %16 {offsets = [2, 0], sizes = [1, 256], strides = [1, 1]} : vector<8x256xf32> to vector<1x256xf32>
    %20 = vector.extract_strided_slice %16 {offsets = [3, 0], sizes = [1, 256], strides = [1, 1]} : vector<8x256xf32> to vector<1x256xf32>
    %21 = vector.extract_strided_slice %16 {offsets = [4, 0], sizes = [1, 256], strides = [1, 1]} : vector<8x256xf32> to vector<1x256xf32>
    %22 = vector.extract_strided_slice %16 {offsets = [5, 0], sizes = [1, 256], strides = [1, 1]} : vector<8x256xf32> to vector<1x256xf32>
    %23 = vector.extract_strided_slice %16 {offsets = [6, 0], sizes = [1, 256], strides = [1, 1]} : vector<8x256xf32> to vector<1x256xf32>
    %24 = vector.extract_strided_slice %16 {offsets = [7, 0], sizes = [1, 256], strides = [1, 1]} : vector<8x256xf32> to vector<1x256xf32>
    %25 = tpu.concatenate %17, %18, %19, %20, %21, %22, %23, %24 in 1 : vector<1x256xf32>, vector<1x256xf32>, vector<1x256xf32>, vector<1x256xf32>, vector<1x256xf32>, vector<1x256xf32>, vector<1x256xf32>, vector<1x256xf32> -> vector<1x2048xf32>
    %26 = vector.extract_strided_slice %7 {offsets = [0, 256], sizes = [8, 256], strides = [1, 1]} : vector<8x512xf32> to vector<8x256xf32>
    %27 = vector.extract_strided_slice %26 {offsets = [0, 0], sizes = [1, 256], strides = [1, 1]} : vector<8x256xf32> to vector<1x256xf32>
    %28 = vector.extract_strided_slice %26 {offsets = [1, 0], sizes = [1, 256], strides = [1, 1]} : vector<8x256xf32> to vector<1x256xf32>
    %29 = vector.extract_strided_slice %26 {offsets = [2, 0], sizes = [1, 256], strides = [1, 1]} : vector<8x256xf32> to vector<1x256xf32>
    %30 = vector.extract_strided_slice %26 {offsets = [3, 0], sizes = [1, 256], strides = [1, 1]} : vector<8x256xf32> to vector<1x256xf32>
    %31 = vector.extract_strided_slice %26 {offsets = [4, 0], sizes = [1, 256], strides = [1, 1]} : vector<8x256xf32> to vector<1x256xf32>
    %32 = vector.extract_strided_slice %26 {offsets = [5, 0], sizes = [1, 256], strides = [1, 1]} : vector<8x256xf32> to vector<1x256xf32>
    %33 = vector.extract_strided_slice %26 {offsets = [6, 0], sizes = [1, 256], strides = [1, 1]} : vector<8x256xf32> to vector<1x256xf32>
    %34 = vector.extract_strided_slice %26 {offsets = [7, 0], sizes = [1, 256], strides = [1, 1]} : vector<8x256xf32> to vector<1x256xf32>
    %35 = tpu.concatenate %27, %28, %29, %30, %31, %32, %33, %34 in 1 : vector<1x256xf32>, vector<1x256xf32>, vector<1x256xf32>, vector<1x256xf32>, vector<1x256xf32>, vector<1x256xf32>, vector<1x256xf32>, vector<1x256xf32> -> vector<1x2048xf32>
    %36 = tpu.concatenate %25, %35 in 0 : vector<1x2048xf32>, vector<1x2048xf32> -> vector<2x2048xf32>
    %c0_11 = arith.constant 0 : index
    %c0_12 = arith.constant 0 : index
    %37 = vector.load %arg6[%c0_11, %c0_12] : memref<2x2048xf32, #tpu.memory_space<vmem>>, vector<2x2048xf32>
    tpu.vector_store %arg6[%c0_11, %c0_12], %36 {strides = array<i32>} : memref<2x2048xf32, #tpu.memory_space<vmem>>, vector<2x2048xf32>,
    %c0_13 = arith.constant 0 : index
    %c0_14 = arith.constant 0 : index
    %38 = vector.load %arg3[%c0_13, %c0_14] : memref<2048x16xf32, #tpu.memory_space<vmem>>, vector<2048x16xf32>
    %cst_15 = arith.constant dense<0.000000e+00> : vector<2x16xf32>
    %39 = tpu.matmul %36, %38, %cst_15 {dimension_numbers = #tpu.dot_dimension_numbers<[1], [0], [0], [1], [0, 0, 1, 1], [], []>} : vector<2x2048xf32>, vector<2048x16xf32>, vector<2x16xf32> -> vector<2x16xf32>
    %c0_16 = arith.constant 0 : index
    %c0_17 = arith.constant 0 : index
    %40 = vector.load %arg4[%c0_16, %c0_17] : memref<1x16xf32, #tpu.memory_space<vmem>>, vector<1x16xf32>
    %41 = vector.broadcast %40 : vector<1x16xf32> to vector<2x16xf32>
    %42 = arith.addf %39, %41 : vector<2x16xf32>
    %c0_18 = arith.constant 0 : index
    %c0_19 = arith.constant 0 : index
    %43 = vector.load %arg7[%c0_18, %c0_19] : memref<2x16xf32, #tpu.memory_space<vmem>>, vector<2x16xf32>
    tpu.vector_store %arg7[%c0_18, %c0_19], %42 {strides = array<i32>} : memref<2x16xf32, #tpu.memory_space<vmem>>, vector<2x16xf32>,
    return
  }
}

</mosaic_0001>

<llo_original>
// kernel: _fused_forward.1
$region0: #{_fused_forward.1}
  #allocation0 [shape = 'u32[]', space=smem, size = 0x4, offset = 0x4, fixed_abs, tag = 'smem constant byte address 0x4 - core index']
  #allocation1 [shape = 'u32[144,128]{1,0:T(1,128)}', space=vmem, size = 0x12000, scoped, tag = 'internal scratch']
  %s0 = inlined_call_operand.vmem [shape: f32[40,512], index: 0, kind: input, shape index: {}]
  %s1 = inlined_call_operand.vmem [shape: f32[8,40], index: 1, kind: input, shape index: {}]
  %s2 = inlined_call_operand.vmem [shape: f32[8,1], index: 2, kind: input, shape index: {}]
  %s3 = inlined_call_operand.vmem [shape: f32[2048,16], index: 3, kind: input, shape index: {}]
  %s4 = inlined_call_operand.vmem [shape: f32[1,16], index: 4, kind: input, shape index: {}]
  %s5 = inlined_call_operand.vmem [shape: f32[2,8,256], index: 5, kind: output, shape index: {0}]
  %s6 = inlined_call_operand.vmem [shape: f32[2,2048], index: 6, kind: output, shape index: {1}]
  %s7 = inlined_call_operand.hbm [shape: f32[2,16], index: 7, kind: output, shape index: {2}]
  %8 = xla_tuple %s5, %s6, %s7
  %s9 = sld [smem:[#allocation0]]
  $region46: #{_fused_forward.1} parent=0
    _
  %s11 = ssub.s32 1, %s9
  %s12 = scalar_select 0, %s11, %s9
  $region1: #{_fused_forward.1} parent=0
    #allocation2 [shape = 'u8[1024]{0}', space=vmem, size = 0x400, scoped, tag = 'output window, operand 2, single buffered']
    #allocation3 [shape = 's32[1]{0}', space=sflag, size = 0x4, scoped, tag = 'scoped memory for _fused_forward.1']
    %13 = vsyncpa [#allocation3], 0
    // Predicated region
    $region2: #{_fused_forward.1} parent=1 // pred_check
      _
    $region3: #{_fused_forward.1} parent=1 // pred_check_branch
      %15 = sbr.rel (0) target = $region5
    $region4: #{_fused_forward.1} parent=1 // pred_region
      _
    $region5: #{_fused_forward.1} parent=1 // pred_fallthru
      _
    // Predicated region
    $region6: #{_fused_forward.1} parent=1 // pred_check
      _
    $region7: #{_fused_forward.1} parent=1 // pred_check_branch
      %17 = sbr.rel (0) target = $region9
    $region8: #{_fused_forward.1} parent=1 // pred_region
      _
    $region9: #{_fused_forward.1} parent=1 // pred_fallthru
      _
    // Predicated region
    $region10: #{_fused_forward.1} parent=1 // pred_check
      _
    $region11: #{_fused_forward.1} parent=1 // pred_check_branch
      %19 = sbr.rel (0) target = $region13
    $region12: #{_fused_forward.1} parent=1 // pred_region
      _
    $region13: #{_fused_forward.1} parent=1 // pred_fallthru
      _
    // Predicated region
    $region14: #{_fused_forward.1} parent=1 // pred_check
      _
    $region15: #{_fused_forward.1} parent=1 // pred_check_branch
      %21 = sbr.rel (0) target = $region17
    $region16: #{_fused_forward.1} parent=1 // pred_region
      _
    $region17: #{_fused_forward.1} parent=1 // pred_fallthru
      _
    // Predicated region
    $region18: #{_fused_forward.1} parent=1 // pred_check
      _
    $region19: #{_fused_forward.1} parent=1 // pred_check_branch
      %23 = sbr.rel (0) target = $region21
    $region20: #{_fused_forward.1} parent=1 // pred_region
      _
    $region21: #{_fused_forward.1} parent=1 // pred_fallthru
      _
    %v24 = vld [vmem:[%s1] sm:$0xff]
    %v25 = vld [vmem:[%s0] sm:$0xff]
    %v26 = vld [vmem:[%s0 + $0x8] sm:$0xff]
    %v27 = vld [vmem:[%s0 + $0x10] sm:$0xff]
    %v28 = vld [vmem:[%s0 + $0x18] sm:$0xff]
    %v29 = vld [vmem:[%s0 + $0x20] sm:$0xff]
    %v30 = vld [vmem:[%s0 + $0x28] sm:$0xff]
    %v31 = vld [vmem:[%s0 + $0x30] sm:$0xff]
    %v32 = vld [vmem:[%s0 + $0x38] sm:$0xff]
    %v33 = vld [vmem:[%s0 + $0x40] sm:$0xff]
    %v34 = vld [vmem:[%s0 + $0x48] sm:$0xff]
    %v35 = vld [vmem:[%s0 + $0x50] sm:$0xff]
    %v36 = vld [vmem:[%s0 + $0x58] sm:$0xff]
    %v37 = vld [vmem:[%s0 + $0x60] sm:$0xff]
    %v38 = vld [vmem:[%s0 + $0x68] sm:$0xff]
    %v39 = vld [vmem:[%s0 + $0x70] sm:$0xff]
    %v40 = vld [vmem:[%s0 + $0x78] sm:$0xff]
    %v41 = vld [vmem:[%s0 + $0x80] sm:$0xff]
    %v42 = vld [vmem:[%s0 + $0x88] sm:$0xff]
    %v43 = vld [vmem:[%s0 + $0x90] sm:$0xff]
    %v44 = vld [vmem:[%s0 + $0x98] sm:$0xff]
    %v45 = vld [vmem:[%s2] sm:$0xff]
    %47 = vset.pattern.permute.xlu0 0
    %48 = vperm.xlu0 %47, %v45
    %v49 = vpop.permute.xlu0 %48
    %vm51 = vcmask 326656
    %v53 = vsel %vm51, %v24, 0
    %55 = vmatprep.subr.mxu0 0.0
    %56 = vmatpush1.msra.mxu0 0.0
    %57 = vmatprep.subr.mxu0 0.0
    %58 = vmatpush1.msra.mxu0 0.0
    %59 = vmatprep.subr.mxu0 0.0
    %60 = vmatpush1.msra.mxu0 0.0
    %61 = vmatprep.subr.mxu0 0.0
    %62 = vmatpush1.msra.mxu0 0.0
    %63 = vmatprep.subr.mxu0 0.0
    %64 = vmatpush1.msra.mxu0 0.0
    %65 = vmatprep.subr.mxu0 0.0
    %66 = vmatpush1.msra.mxu0 0.0
    %67 = vmatprep.subr.mxu0 0.0
    %68 = vmatpush1.msra.mxu0 0.0
    %69 = vmatprep.subr.mxu0 0.0
    %70 = vmatpush1.msra.mxu0 0.0
    %71 = vmatprep.subr.mxu0 0.0
    %72 = vmatpush1.msra.mxu0 0.0
    %73 = vmatprep.subr.mxu0 0.0
    %74 = vmatpush1.msra.mxu0 0.0
    %75 = vmatprep.subr.mxu0 0.0
    %76 = vmatpush1.msra.mxu0 0.0
    %77 = vmatprep.subr.mxu0 %v42
    %78 = vmatpush1.msra.mxu0 %v41
    %79 = vmatprep.subr.mxu0 %v38
    %80 = vmatpush1.msra.mxu0 %v37
    %81 = vmatprep.subr.mxu0 %v34
    %82 = vmatpush1.msra.mxu0 %v33
    %83 = vmatprep.subr.mxu0 %v30
    %84 = vmatpush1.msra.mxu0 %v29
    %85 = vmatprep.subr.mxu0 %v26
    %86 = vmatpush1.msra.mxu0 %v25
    %87 = vmatprep.subr.mxu0 0.0
    %88 = vmatpush2.msra.mxu0 0.0
    %89 = vmatprep.subr.mxu0 0.0
    %90 = vmatpush2.msra.mxu0 0.0
    %91 = vmatprep.subr.mxu0 0.0
    %92 = vmatpush2.msra.mxu0 0.0
    %93 = vmatprep.subr.mxu0 0.0
    %94 = vmatpush2.msra.mxu0 0.0
    %95 = vmatprep.subr.mxu0 0.0
    %96 = vmatpush2.msra.mxu0 0.0
    %97 = vmatprep.subr.mxu0 0.0
    %98 = vmatpush2.msra.mxu0 0.0
    %99 = vmatprep.subr.mxu0 0.0
    %100 = vmatpush2.msra.mxu0 0.0
    %101 = vmatprep.subr.mxu0 0.0
    %102 = vmatpush2.msra.mxu0 0.0
    %103 = vmatprep.subr.mxu0 0.0
    %104 = vmatpush2.msra.mxu0 0.0
    %105 = vmatprep.subr.mxu0 0.0
    %106 = vmatpush2.msra.mxu0 0.0
    %107 = vmatprep.subr.mxu0 0.0
    %108 = vmatpush2.msra.mxu0 0.0
    %109 = vmatprep.subr.mxu0 0.0
    %110 = vmatpush2.msra.mxu0 0.0
    %111 = vmatprep.subr.mxu0 0.0
    %112 = vmatpush2.msra.mxu0 0.0
    %113 = vmatprep.subr.mxu0 0.0
    %114 = vmatpush2.msra.mxu0 0.0
    %115 = vmatprep.subr.mxu0 0.0
    %116 = vmatpush2.msra.mxu0 0.0
    %117 = vmatprep.subr.mxu0 0.0
    %118 = vmatpush2.msra.mxu0 0.0
    %119 = vmatprep.mubr.f32.mxu0 0.0
    %120 = vmatmul.mubr.f32.gmra.mxu0 %v53
    %v121 = vpop.f32.mrf.mxu0
    %v122 = vadd.f32 %v49, %v121
    %v123 = vpop.f32.mrf.mxu0
    %v124 = vadd.f32 %v49, %v123
    %125 = vdwg.mxu0
    %126 = vmatprep.subr.mxu0 0.0
    %127 = vmatpush1.msra.mxu0 0.0
    %128 = vmatprep.subr.mxu0 0.0
    %129 = vmatpush1.msra.mxu0 0.0
    %130 = vmatprep.subr.mxu0 0.0
    %131 = vmatpush1.msra.mxu0 0.0
    %132 = vmatprep.subr.mxu0 0.0
    %133 = vmatpush1.msra.mxu0 0.0
    %134 = vmatprep.subr.mxu0 0.0
    %135 = vmatpush1.msra.mxu0 0.0
    %136 = vmatprep.subr.mxu0 0.0
    %137 = vmatpush1.msra.mxu0 0.0
    %138 = vmatprep.subr.mxu0 0.0
    %139 = vmatpush1.msra.mxu0 0.0
    %140 = vmatprep.subr.mxu0 0.0
    %141 = vmatpush1.msra.mxu0 0.0
    %142 = vmatprep.subr.mxu0 0.0
    %143 = vmatpush1.msra.mxu0 0.0
    %144 = vmatprep.subr.mxu0 0.0
    %145 = vmatpush1.msra.mxu0 0.0
    %146 = vmatprep.subr.mxu0 0.0
    %147 = vmatpush1.msra.mxu0 0.0
    %148 = vmatprep.subr.mxu0 %v44
    %149 = vmatpush1.msra.mxu0 %v43
    %150 = vmatprep.subr.mxu0 %v40
    %151 = vmatpush1.msra.mxu0 %v39
    %152 = vmatprep.subr.mxu0 %v36
    %153 = vmatpush1.msra.mxu0 %v35
    %154 = vmatprep.subr.mxu0 %v32
    %155 = vmatpush1.msra.mxu0 %v31
    %156 = vmatprep.subr.mxu0 %v28
    %157 = vmatpush1.msra.mxu0 %v27
    %158 = vmatprep.subr.mxu0 0.0
    %159 = vmatpush2.msra.mxu0 0.0
    %160 = vmatprep.subr.mxu0 0.0
    %161 = vmatpush2.msra.mxu0 0.0
    %162 = vmatprep.subr.mxu0 0.0
    %163 = vmatpush2.msra.mxu0 0.0
    %164 = vmatprep.subr.mxu0 0.0
    %165 = vmatpush2.msra.mxu0 0.0
    %166 = vmatprep.subr.mxu0 0.0
    %167 = vmatpush2.msra.mxu0 0.0
    %168 = vmatprep.subr.mxu0 0.0
    %169 = vmatpush2.msra.mxu0 0.0
    %170 = vmatprep.subr.mxu0 0.0
    %171 = vmatpush2.msra.mxu0 0.0
    %172 = vmatprep.subr.mxu0 0.0
    %173 = vmatpush2.msra.mxu0 0.0
    %174 = vmatprep.subr.mxu0 0.0
    %175 = vmatpush2.msra.mxu0 0.0
    %176 = vmatprep.subr.mxu0 0.0
    %177 = vmatpush2.msra.mxu0 0.0
    %178 = vmatprep.subr.mxu0 0.0
    %179 = vmatpush2.msra.mxu0 0.0
    %180 = vmatprep.subr.mxu0 0.0
    %181 = vmatpush2.msra.mxu0 0.0
    %182 = vmatprep.subr.mxu0 0.0
    %183 = vmatpush2.msra.mxu0 0.0
    %184 = vmatprep.subr.mxu0 0.0
    %185 = vmatpush2.msra.mxu0 0.0
    %186 = vmatprep.subr.mxu0 0.0
    %187 = vmatpush2.msra.mxu0 0.0
    %188 = vmatprep.subr.mxu0 0.0
    %189 = vmatpush2.msra.mxu0 0.0
    %190 = vmatprep.mubr.f32.mxu0 0.0
    %191 = vmatmul.mubr.f32.gmra.mxu0 %v53
    %v192 = vpop.f32.mrf.mxu0
    %v193 = vadd.f32 %v49, %v192
    %v194 = vpop.f32.mrf.mxu0
    %v195 = vadd.f32 %v49, %v194
    %196 = vdwg.mxu0
    %v197 = vmax.f32 %v122, 0.0
    %v198 = vmax.f32 %v124, 0.0
    %v199 = vmax.f32 %v193, 0.0
    %v200 = vmax.f32 %v195, 0.0
    %201 = vst [vmem:[%s5] sm:$0xff] %v122
    %202 = vst [vmem:[%s5 + $0x8] sm:$0xff] %v124
    %s203 = scalar_lea.vmem %s5, 16
    %204 = vst [vmem:[%s203] sm:$0xff] %v193
    %205 = vst [vmem:[%s203 + $0x8] sm:$0xff] %v195
    %v208 = vrot.slane %v197, 1
    %v209 = vrot.slane %v198, 1
    %v212 = vrot.slane %v197, 2
    %v213 = vrot.slane %v198, 2
    %v216 = vrot.slane %v197, 3
    %v217 = vrot.slane %v198, 3
    %v220 = vrot.slane %v197, 4
    %v221 = vrot.slane %v198, 4
    %v224 = vrot.slane %v197, 5
    %v225 = vrot.slane %v198, 5
    %v228 = vrot.slane %v197, 6
    %v229 = vrot.slane %v198, 6
    %v232 = vrot.slane %v197, 7
    %v233 = vrot.slane %v198, 7
    %v238 = vrot.slane %v199, 1
    %v239 = vrot.slane %v200, 1
    %v240 = vrot.slane %v199, 2
    %v241 = vrot.slane %v200, 2
    %v242 = vrot.slane %v199, 3
    %v243 = vrot.slane %v200, 3
    %v244 = vrot.slane %v199, 4
    %v245 = vrot.slane %v200, 4
    %v246 = vrot.slane %v199, 5
    %v247 = vrot.slane %v200, 5
    %v248 = vrot.slane %v199, 6
    %v249 = vrot.slane %v200, 6
    %v250 = vrot.slane %v199, 7
    %v251 = vrot.slane %v200, 7
    %v252 = vrot.slane %v238, 7
    %v253 = vrot.slane %v239, 7
    %v254 = vrot.slane %v240, 7
    %v255 = vrot.slane %v241, 7
    %v256 = vrot.slane %v242, 7
    %v257 = vrot.slane %v243, 7
    %v258 = vrot.slane %v244, 7
    %v259 = vrot.slane %v245, 7
    %v260 = vrot.slane %v246, 7
    %v261 = vrot.slane %v247, 7
    %v262 = vrot.slane %v248, 7
    %v263 = vrot.slane %v249, 7
    %v264 = vrot.slane %v250, 7
    %v265 = vrot.slane %v251, 7
    %vm282 = vcmask 1040384
    %v283 = vsel %vm282, %v197, %v250
    %v284 = vsel %vm282, %v198, %v251
    %v285 = vsel %vm282, %v208, %v252
    %v286 = vsel %vm282, %v209, %v253
    %v287 = vsel %vm282, %v212, %v254
    %v288 = vsel %vm282, %v213, %v255
    %v289 = vsel %vm282, %v216, %v256
    %v290 = vsel %vm282, %v217, %v257
    %v291 = vsel %vm282, %v220, %v258
    %v292 = vsel %vm282, %v221, %v259
    %v293 = vsel %vm282, %v224, %v260
    %v294 = vsel %vm282, %v225, %v261
    %v295 = vsel %vm282, %v228, %v262
    %v296 = vsel %vm282, %v229, %v263
    %v297 = vsel %vm282, %v232, %v264
    %v298 = vsel %vm282, %v233, %v265
    %v315 = vcombine.low %v283, %v284
    %v316 = vcombine.low %v285, %v286
    %v318 = vunpack.c.l.s4 1983009808
    %v319 = vunpack.c.0.s8 %v318
    %v320 = vlaneseq
    %v321 = vshrl.u32 %v320, 7
    %v322 = vsub.s32 %v319, %v321
    %v323 = vrot.slane %v315, %v322
    %v325 = vunpack.c.l.s4 1983009808
    %v326 = vunpack.c.0.s8 %v325
    %v327 = vlaneseq
    %v328 = vshrl.u32 %v327, 7
    %v329 = vsub.s32 %v326, %v328
    %v330 = vrot.slane %v316, %v329
    %v331 = vcombine.low %v323, %v330
    %v332 = vcombine.low %v287, %v288
    %v333 = vcombine.low %v289, %v290
    %v335 = vunpack.c.l.s4 1983009808
    %v336 = vunpack.c.0.s8 %v335
    %v337 = vlaneseq
    %v338 = vshrl.u32 %v337, 7
    %v339 = vsub.s32 %v336, %v338
    %v340 = vrot.slane %v332, %v339
    %v342 = vunpack.c.l.s4 1983009808
    %v343 = vunpack.c.0.s8 %v342
    %v344 = vlaneseq
    %v345 = vshrl.u32 %v344, 7
    %v346 = vsub.s32 %v343, %v345
    %v347 = vrot.slane %v333, %v346
    %v348 = vcombine.low %v340, %v347
    %v349 = vcombine.low %v291, %v292
    %v350 = vcombine.low %v293, %v294
    %v352 = vunpack.c.l.s4 1983009808
    %v353 = vunpack.c.0.s8 %v352
    %v354 = vlaneseq
    %v355 = vshrl.u32 %v354, 7
    %v356 = vsub.s32 %v353, %v355
    %v357 = vrot.slane %v349, %v356
    %v359 = vunpack.c.l.s4 1983009808
    %v360 = vunpack.c.0.s8 %v359
    %v361 = vlaneseq
    %v362 = vshrl.u32 %v361, 7
    %v363 = vsub.s32 %v360, %v362
    %v364 = vrot.slane %v350, %v363
    %v365 = vcombine.low %v357, %v364
    %v366 = vcombine.low %v295, %v296
    %v367 = vcombine.low %v297, %v298
    %v369 = vunpack.c.l.s4 1983009808
    %v370 = vunpack.c.0.s8 %v369
    %v371 = vlaneseq
    %v372 = vshrl.u32 %v371, 7
    %v373 = vsub.s32 %v370, %v372
    %v374 = vrot.slane %v366, %v373
    %v376 = vunpack.c.l.s4 1983009808
    %v377 = vunpack.c.0.s8 %v376
    %v378 = vlaneseq
    %v379 = vshrl.u32 %v378, 7
    %v380 = vsub.s32 %v377, %v379
    %v381 = vrot.slane %v367, %v380
    %v382 = vcombine.low %v374, %v381
    %387 = vst [vmem:[%s6] sm:$0xff] %v331
    %388 = vst [vmem:[%s6 + $0x8] sm:$0xff] %v348
    %389 = vst [vmem:[%s6 + $0x10] sm:$0xff] %v365
    %390 = vst [vmem:[%s6 + $0x18] sm:$0xff] %v382
    %v391 = vld [vmem:[%s3] sm:$0xff]
    %v392 = vld [vmem:[%s3 + $0x8] sm:$0xff]
    %v393 = vld [vmem:[%s3 + $0x10] sm:$0xff]
    %v394 = vld [vmem:[%s3 + $0x18] sm:$0xff]
    %v395 = vld [vmem:[%s3 + $0x20] sm:$0xff]
    %v396 = vld [vmem:[%s3 + $0x28] sm:$0xff]
    %v397 = vld [vmem:[%s3 + $0x30] sm:$0xff]
    %v398 = vld [vmem:[%s3 + $0x38] sm:$0xff]
    %v399 = vld [vmem:[%s3 + $0x40] sm:$0xff]
    %v400 = vld [vmem:[%s3 + $0x48] sm:$0xff]
    %v401 = vld [vmem:[%s3 + $0x50] sm:$0xff]
    %v402 = vld [vmem:[%s3 + $0x58] sm:$0xff]
    %v403 = vld [vmem:[%s3 + $0x60] sm:$0xff]
    %v404 = vld [vmem:[%s3 + $0x68] sm:$0xff]
    %v405 = vld [vmem:[%s3 + $0x70] sm:$0xff]
    %v406 = vld [vmem:[%s3 + $0x78] sm:$0xff]
    %v407 = vld [vmem:[%s3 + $0x80] sm:$0xff]
    %v408 = vld [vmem:[%s3 + $0x88] sm:$0xff]
    %v409 = vld [vmem:[%s3 + $0x90] sm:$0xff]
    %v410 = vld [vmem:[%s3 + $0x98] sm:$0xff]
    %v411 = vld [vmem:[%s3 + $0xa0] sm:$0xff]
    %v412 = vld [vmem:[%s3 + $0xa8] sm:$0xff]
    %v413 = vld [vmem:[%s3 + $0xb0] sm:$0xff]
    %v414 = vld [vmem:[%s3 + $0xb8] sm:$0xff]
    %v415 = vld [vmem:[%s3 + $0xc0] sm:$0xff]
    %v416 = vld [vmem:[%s3 + $0xc8] sm:$0xff]
    %v417 = vld [vmem:[%s3 + $0xd0] sm:$0xff]
    %v418 = vld [vmem:[%s3 + $0xd8] sm:$0xff]
    %v419 = vld [vmem:[%s3 + $0xe0] sm:$0xff]
    %v420 = vld [vmem:[%s3 + $0xe8] sm:$0xff]
    %v421 = vld [vmem:[%s3 + $0xf0] sm:$0xff]
    %v422 = vld [vmem:[%s3 + $0xf8] sm:$0xff]
    %v423 = vld [vmem:[%s3 + $0x100] sm:$0xff]
    %v424 = vld [vmem:[%s3 + $0x108] sm:$0xff]
    %v425 = vld [vmem:[%s3 + $0x110] sm:$0xff]
    %v426 = vld [vmem:[%s3 + $0x118] sm:$0xff]
    %v427 = vld [vmem:[%s3 + $0x120] sm:$0xff]
    %v428 = vld [vmem:[%s3 + $0x128] sm:$0xff]
    %v429 = vld [vmem:[%s3 + $0x130] sm:$0xff]
    %v430 = vld [vmem:[%s3 + $0x138] sm:$0xff]
    %v431 = vld [vmem:[%s3 + $0x140] sm:$0xff]
    %v432 = vld [vmem:[%s3 + $0x148] sm:$0xff]
    %v433 = vld [vmem:[%s3 + $0x150] sm:$0xff]
    %v434 = vld [vmem:[%s3 + $0x158] sm:$0xff]
    %v435 = vld [vmem:[%s3 + $0x160] sm:$0xff]
    %v436 = vld [vmem:[%s3 + $0x168] sm:$0xff]
    %v437 = vld [vmem:[%s3 + $0x170] sm:$0xff]
    %v438 = vld [vmem:[%s3 + $0x178] sm:$0xff]
    %v439 = vld [vmem:[%s3 + $0x180] sm:$0xff]
    %v440 = vld [vmem:[%s3 + $0x188] sm:$0xff]
    %v441 = vld [vmem:[%s3 + $0x190] sm:$0xff]
    %v442 = vld [vmem:[%s3 + $0x198] sm:$0xff]
    %v443 = vld [vmem:[%s3 + $0x1a0] sm:$0xff]
    %v444 = vld [vmem:[%s3 + $0x1a8] sm:$0xff]
    %v445 = vld [vmem:[%s3 + $0x1b0] sm:$0xff]
    %v446 = vld [vmem:[%s3 + $0x1b8] sm:$0xff]
    %v447 = vld [vmem:[%s3 + $0x1c0] sm:$0xff]
    %v448 = vld [vmem:[%s3 + $0x1c8] sm:$0xff]
    %v449 = vld [vmem:[%s3 + $0x1d0] sm:$0xff]
    %v450 = vld [vmem:[%s3 + $0x1d8] sm:$0xff]
    %v451 = vld [vmem:[%s3 + $0x1e0] sm:$0xff]
    %v452 = vld [vmem:[%s3 + $0x1e8] sm:$0xff]
    %v453 = vld [vmem:[%s3 + $0x1f0] sm:$0xff]
    %v454 = vld [vmem:[%s3 + $0x1f8] sm:$0xff]
    %v455 = vld [vmem:[%s3 + $0x200] sm:$0xff]
    %v456 = vld [vmem:[%s3 + $0x208] sm:$0xff]
    %v457 = vld [vmem:[%s3 + $0x210] sm:$0xff]
    %v458 = vld [vmem:[%s3 + $0x218] sm:$0xff]
    %v459 = vld [vmem:[%s3 + $0x220] sm:$0xff]
    %v460 = vld [vmem:[%s3 + $0x228] sm:$0xff]
    %v461 = vld [vmem:[%s3 + $0x230] sm:$0xff]
    %v462 = vld [vmem:[%s3 + $0x238] sm:$0xff]
    %v463 = vld [vmem:[%s3 + $0x240] sm:$0xff]
    %v464 = vld [vmem:[%s3 + $0x248] sm:$0xff]
    %v465 = vld [vmem:[%s3 + $0x250] sm:$0xff]
    %v466 = vld [vmem:[%s3 + $0x258] sm:$0xff]
    %v467 = vld [vmem:[%s3 + $0x260] sm:$0xff]
    %v468 = vld [vmem:[%s3 + $0x268] sm:$0xff]
    %v469 = vld [vmem:[%s3 + $0x270] sm:$0xff]
    %v470 = vld [vmem:[%s3 + $0x278] sm:$0xff]
    %v471 = vld [vmem:[%s3 + $0x280] sm:$0xff]
    %v472 = vld [vmem:[%s3 + $0x288] sm:$0xff]
    %v473 = vld [vmem:[%s3 + $0x290] sm:$0xff]
    %v474 = vld [vmem:[%s3 + $0x298] sm:$0xff]
    %v475 = vld [vmem:[%s3 + $0x2a0] sm:$0xff]
    %v476 = vld [vmem:[%s3 + $0x2a8] sm:$0xff]
    %v477 = vld [vmem:[%s3 + $0x2b0] sm:$0xff]
    %v478 = vld [vmem:[%s3 + $0x2b8] sm:$0xff]
    %v479 = vld [vmem:[%s3 + $0x2c0] sm:$0xff]
    %v480 = vld [vmem:[%s3 + $0x2c8] sm:$0xff]
    %v481 = vld [vmem:[%s3 + $0x2d0] sm:$0xff]
    %v482 = vld [vmem:[%s3 + $0x2d8] sm:$0xff]
    %v483 = vld [vmem:[%s3 + $0x2e0] sm:$0xff]
    %v484 = vld [vmem:[%s3 + $0x2e8] sm:$0xff]
    %v485 = vld [vmem:[%s3 + $0x2f0] sm:$0xff]
    %v486 = vld [vmem:[%s3 + $0x2f8] sm:$0xff]
    %v487 = vld [vmem:[%s3 + $0x300] sm:$0xff]
    %v488 = vld [vmem:[%s3 + $0x308] sm:$0xff]
    %v489 = vld [vmem:[%s3 + $0x310] sm:$0xff]
    %v490 = vld [vmem:[%s3 + $0x318] sm:$0xff]
    %v491 = vld [vmem:[%s3 + $0x320] sm:$0xff]
    %v492 = vld [vmem:[%s3 + $0x328] sm:$0xff]
    %v493 = vld [vmem:[%s3 + $0x330] sm:$0xff]
    %v494 = vld [vmem:[%s3 + $0x338] sm:$0xff]
    %v495 = vld [vmem:[%s3 + $0x340] sm:$0xff]
    %v496 = vld [vmem:[%s3 + $0x348] sm:$0xff]
    %v497 = vld [vmem:[%s3 + $0x350] sm:$0xff]
    %v498 = vld [vmem:[%s3 + $0x358] sm:$0xff]
    %v499 = vld [vmem:[%s3 + $0x360] sm:$0xff]
    %v500 = vld [vmem:[%s3 + $0x368] sm:$0xff]
    %v501 = vld [vmem:[%s3 + $0x370] sm:$0xff]
    %v502 = vld [vmem:[%s3 + $0x378] sm:$0xff]
    %v503 = vld [vmem:[%s3 + $0x380] sm:$0xff]
    %v504 = vld [vmem:[%s3 + $0x388] sm:$0xff]
    %v505 = vld [vmem:[%s3 + $0x390] sm:$0xff]
    %v506 = vld [vmem:[%s3 + $0x398] sm:$0xff]
    %v507 = vld [vmem:[%s3 + $0x3a0] sm:$0xff]
    %v508 = vld [vmem:[%s3 + $0x3a8] sm:$0xff]
    %v509 = vld [vmem:[%s3 + $0x3b0] sm:$0xff]
    %v510 = vld [vmem:[%s3 + $0x3b8] sm:$0xff]
    %v511 = vld [vmem:[%s3 + $0x3c0] sm:$0xff]
    %v512 = vld [vmem:[%s3 + $0x3c8] sm:$0xff]
    %v513 = vld [vmem:[%s3 + $0x3d0] sm:$0xff]
    %v514 = vld [vmem:[%s3 + $0x3d8] sm:$0xff]
    %v515 = vld [vmem:[%s3 + $0x3e0] sm:$0xff]
    %v516 = vld [vmem:[%s3 + $0x3e8] sm:$0xff]
    %v517 = vld [vmem:[%s3 + $0x3f0] sm:$0xff]
    %v518 = vld [vmem:[%s3 + $0x3f8] sm:$0xff]
    %v519 = vld [vmem:[%s3 + $0x400] sm:$0xff]
    %v520 = vld [vmem:[%s3 + $0x408] sm:$0xff]
    %v521 = vld [vmem:[%s3 + $0x410] sm:$0xff]
    %v522 = vld [vmem:[%s3 + $0x418] sm:$0xff]
    %v523 = vld [vmem:[%s3 + $0x420] sm:$0xff]
    %v524 = vld [vmem:[%s3 + $0x428] sm:$0xff]
    %v525 = vld [vmem:[%s3 + $0x430] sm:$0xff]
    %v526 = vld [vmem:[%s3 + $0x438] sm:$0xff]
    %v527 = vld [vmem:[%s3 + $0x440] sm:$0xff]
    %v528 = vld [vmem:[%s3 + $0x448] sm:$0xff]
    %v529 = vld [vmem:[%s3 + $0x450] sm:$0xff]
    %v530 = vld [vmem:[%s3 + $0x458] sm:$0xff]
    %v531 = vld [vmem:[%s3 + $0x460] sm:$0xff]
    %v532 = vld [vmem:[%s3 + $0x468] sm:$0xff]
    %v533 = vld [vmem:[%s3 + $0x470] sm:$0xff]
    %v534 = vld [vmem:[%s3 + $0x478] sm:$0xff]
    %v535 = vld [vmem:[%s3 + $0x480] sm:$0xff]
    %v536 = vld [vmem:[%s3 + $0x488] sm:$0xff]
    %v537 = vld [vmem:[%s3 + $0x490] sm:$0xff]
    %v538 = vld [vmem:[%s3 + $0x498] sm:$0xff]
    %v539 = vld [vmem:[%s3 + $0x4a0] sm:$0xff]
    %v540 = vld [vmem:[%s3 + $0x4a8] sm:$0xff]
    %v541 = vld [vmem:[%s3 + $0x4b0] sm:$0xff]
    %v542 = vld [vmem:[%s3 + $0x4b8] sm:$0xff]
    %v543 = vld [vmem:[%s3 + $0x4c0] sm:$0xff]
    %v544 = vld [vmem:[%s3 + $0x4c8] sm:$0xff]
    %v545 = vld [vmem:[%s3 + $0x4d0] sm:$0xff]
    %v546 = vld [vmem:[%s3 + $0x4d8] sm:$0xff]
    %v547 = vld [vmem:[%s3 + $0x4e0] sm:$0xff]
    %v548 = vld [vmem:[%s3 + $0x4e8] sm:$0xff]
    %v549 = vld [vmem:[%s3 + $0x4f0] sm:$0xff]
    %v550 = vld [vmem:[%s3 + $0x4f8] sm:$0xff]
    %v551 = vld [vmem:[%s3 + $0x500] sm:$0xff]
    %v552 = vld [vmem:[%s3 + $0x508] sm:$0xff]
    %v553 = vld [vmem:[%s3 + $0x510] sm:$0xff]
    %v554 = vld [vmem:[%s3 + $0x518] sm:$0xff]
    %v555 = vld [vmem:[%s3 + $0x520] sm:$0xff]
    %v556 = vld [vmem:[%s3 + $0x528] sm:$0xff]
    %v557 = vld [vmem:[%s3 + $0x530] sm:$0xff]
    %v558 = vld [vmem:[%s3 + $0x538] sm:$0xff]
    %v559 = vld [vmem:[%s3 + $0x540] sm:$0xff]
    %v560 = vld [vmem:[%s3 + $0x548] sm:$0xff]
    %v561 = vld [vmem:[%s3 + $0x550] sm:$0xff]
    %v562 = vld [vmem:[%s3 + $0x558] sm:$0xff]
    %v563 = vld [vmem:[%s3 + $0x560] sm:$0xff]
    %v564 = vld [vmem:[%s3 + $0x568] sm:$0xff]
    %v565 = vld [vmem:[%s3 + $0x570] sm:$0xff]
    %v566 = vld [vmem:[%s3 + $0x578] sm:$0xff]
    %v567 = vld [vmem:[%s3 + $0x580] sm:$0xff]
    %v568 = vld [vmem:[%s3 + $0x588] sm:$0xff]
    %v569 = vld [vmem:[%s3 + $0x590] sm:$0xff]
    %v570 = vld [vmem:[%s3 + $0x598] sm:$0xff]
    %v571 = vld [vmem:[%s3 + $0x5a0] sm:$0xff]
    %v572 = vld [vmem:[%s3 + $0x5a8] sm:$0xff]
    %v573 = vld [vmem:[%s3 + $0x5b0] sm:$0xff]
    %v574 = vld [vmem:[%s3 + $0x5b8] sm:$0xff]
    %v575 = vld [vmem:[%s3 + $0x5c0] sm:$0xff]
    %v576 = vld [vmem:[%s3 + $0x5c8] sm:$0xff]
    %v577 = vld [vmem:[%s3 + $0x5d0] sm:$0xff]
    %v578 = vld [vmem:[%s3 + $0x5d8] sm:$0xff]
    %v579 = vld [vmem:[%s3 + $0x5e0] sm:$0xff]
    %v580 = vld [vmem:[%s3 + $0x5e8] sm:$0xff]
    %v581 = vld [vmem:[%s3 + $0x5f0] sm:$0xff]
    %v582 = vld [vmem:[%s3 + $0x5f8] sm:$0xff]
    %v583 = vld [vmem:[%s3 + $0x600] sm:$0xff]
    %v584 = vld [vmem:[%s3 + $0x608] sm:$0xff]
    %v585 = vld [vmem:[%s3 + $0x610] sm:$0xff]
    %v586 = vld [vmem:[%s3 + $0x618] sm:$0xff]
    %v587 = vld [vmem:[%s3 + $0x620] sm:$0xff]
    %v588 = vld [vmem:[%s3 + $0x628] sm:$0xff]
    %v589 = vld [vmem:[%s3 + $0x630] sm:$0xff]
    %v590 = vld [vmem:[%s3 + $0x638] sm:$0xff]
    %v591 = vld [vmem:[%s3 + $0x640] sm:$0xff]
    %v592 = vld [vmem:[%s3 + $0x648] sm:$0xff]
    %v593 = vld [vmem:[%s3 + $0x650] sm:$0xff]
    %v594 = vld [vmem:[%s3 + $0x658] sm:$0xff]
    %v595 = vld [vmem:[%s3 + $0x660] sm:$0xff]
    %v596 = vld [vmem:[%s3 + $0x668] sm:$0xff]
    %v597 = vld [vmem:[%s3 + $0x670] sm:$0xff]
    %v598 = vld [vmem:[%s3 + $0x678] sm:$0xff]
    %v599 = vld [vmem:[%s3 + $0x680] sm:$0xff]
    %v600 = vld [vmem:[%s3 + $0x688] sm:$0xff]
    %v601 = vld [vmem:[%s3 + $0x690] sm:$0xff]
    %v602 = vld [vmem:[%s3 + $0x698] sm:$0xff]
    %v603 = vld [vmem:[%s3 + $0x6a0] sm:$0xff]
    %v604 = vld [vmem:[%s3 + $0x6a8] sm:$0xff]
    %v605 = vld [vmem:[%s3 + $0x6b0] sm:$0xff]
    %v606 = vld [vmem:[%s3 + $0x6b8] sm:$0xff]
    %v607 = vld [vmem:[%s3 + $0x6c0] sm:$0xff]
    %v608 = vld [vmem:[%s3 + $0x6c8] sm:$0xff]
    %v609 = vld [vmem:[%s3 + $0x6d0] sm:$0xff]
    %v610 = vld [vmem:[%s3 + $0x6d8] sm:$0xff]
    %v611 = vld [vmem:[%s3 + $0x6e0] sm:$0xff]
    %v612 = vld [vmem:[%s3 + $0x6e8] sm:$0xff]
    %v613 = vld [vmem:[%s3 + $0x6f0] sm:$0xff]
    %v614 = vld [vmem:[%s3 + $0x6f8] sm:$0xff]
    %v615 = vld [vmem:[%s3 + $0x700] sm:$0xff]
    %v616 = vld [vmem:[%s3 + $0x708] sm:$0xff]
    %v617 = vld [vmem:[%s3 + $0x710] sm:$0xff]
    %v618 = vld [vmem:[%s3 + $0x718] sm:$0xff]
    %v619 = vld [vmem:[%s3 + $0x720] sm:$0xff]
    %v620 = vld [vmem:[%s3 + $0x728] sm:$0xff]
    %v621 = vld [vmem:[%s3 + $0x730] sm:$0xff]
    %v622 = vld [vmem:[%s3 + $0x738] sm:$0xff]
    %v623 = vld [vmem:[%s3 + $0x740] sm:$0xff]
    %v624 = vld [vmem:[%s3 + $0x748] sm:$0xff]
    %v625 = vld [vmem:[%s3 + $0x750] sm:$0xff]
    %v626 = vld [vmem:[%s3 + $0x758] sm:$0xff]
    %v627 = vld [vmem:[%s3 + $0x760] sm:$0xff]
    %v628 = vld [vmem:[%s3 + $0x768] sm:$0xff]
    %v629 = vld [vmem:[%s3 + $0x770] sm:$0xff]
    %v630 = vld [vmem:[%s3 + $0x778] sm:$0xff]
    %v631 = vld [vmem:[%s3 + $0x780] sm:$0xff]
    %v632 = vld [vmem:[%s3 + $0x788] sm:$0xff]
    %v633 = vld [vmem:[%s3 + $0x790] sm:$0xff]
    %v634 = vld [vmem:[%s3 + $0x798] sm:$0xff]
    %v635 = vld [vmem:[%s3 + $0x7a0] sm:$0xff]
    %v636 = vld [vmem:[%s3 + $0x7a8] sm:$0xff]
    %v637 = vld [vmem:[%s3 + $0x7b0] sm:$0xff]
    %v638 = vld [vmem:[%s3 + $0x7b8] sm:$0xff]
    %v639 = vld [vmem:[%s3 + $0x7c0] sm:$0xff]
    %v640 = vld [vmem:[%s3 + $0x7c8] sm:$0xff]
    %v641 = vld [vmem:[%s3 + $0x7d0] sm:$0xff]
    %v642 = vld [vmem:[%s3 + $0x7d8] sm:$0xff]
    %v643 = vld [vmem:[%s3 + $0x7e0] sm:$0xff]
    %v644 = vld [vmem:[%s3 + $0x7e8] sm:$0xff]
    %v645 = vld [vmem:[%s3 + $0x7f0] sm:$0xff]
    %v646 = vld [vmem:[%s3 + $0x7f8] sm:$0xff]
    %v647 = vld [vmem:[%s4] sm:$0x1]
    %v649 = vlaneseq
    %v650 = vshrl.u32 %v649, 7
    %v651 = vsub.s32 0, %v650
    %v652 = vrot.slane %v647, %v651
    %654 = vmatprep.subr.mxu0 0.0
    %655 = vmatpush1.msra.mxu0 %v406
    %656 = vmatprep.subr.mxu0 0.0
    %657 = vmatpush1.msra.mxu0 %v405
    %658 = vmatprep.subr.mxu0 0.0
    %659 = vmatpush1.msra.mxu0 %v404
    %660 = vmatprep.subr.mxu0 0.0
    %661 = vmatpush1.msra.mxu0 %v403
    %662 = vmatprep.subr.mxu0 0.0
    %663 = vmatpush1.msra.mxu0 %v402
    %664 = vmatprep.subr.mxu0 0.0
    %665 = vmatpush1.msra.mxu0 %v401
    %666 = vmatprep.subr.mxu0 0.0
    %667 = vmatpush1.msra.mxu0 %v400
    %668 = vmatprep.subr.mxu0 0.0
    %669 = vmatpush1.msra.mxu0 %v399
    %670 = vmatprep.subr.mxu0 0.0
    %671 = vmatpush1.msra.mxu0 %v398
    %672 = vmatprep.subr.mxu0 0.0
    %673 = vmatpush1.msra.mxu0 %v397
    %674 = vmatprep.subr.mxu0 0.0
    %675 = vmatpush1.msra.mxu0 %v396
    %676 = vmatprep.subr.mxu0 0.0
    %677 = vmatpush1.msra.mxu0 %v395
    %678 = vmatprep.subr.mxu0 0.0
    %679 = vmatpush1.msra.mxu0 %v394
    %680 = vmatprep.subr.mxu0 0.0
    %681 = vmatpush1.msra.mxu0 %v393
    %682 = vmatprep.subr.mxu0 0.0
    %683 = vmatpush1.msra.mxu0 %v392
    %684 = vmatprep.subr.mxu0 0.0
    %685 = vmatpush1.msra.mxu0 %v391
    %686 = vmatprep.subr.mxu0 0.0
    %687 = vmatpush2.msra.mxu0 %v422
    %688 = vmatprep.subr.mxu0 0.0
    %689 = vmatpush2.msra.mxu0 %v421
    %690 = vmatprep.subr.mxu0 0.0
    %691 = vmatpush2.msra.mxu0 %v420
    %692 = vmatprep.subr.mxu0 0.0
    %693 = vmatpush2.msra.mxu0 %v419
    %694 = vmatprep.subr.mxu0 0.0
    %695 = vmatpush2.msra.mxu0 %v418
    %696 = vmatprep.subr.mxu0 0.0
    %697 = vmatpush2.msra.mxu0 %v417
    %698 = vmatprep.subr.mxu0 0.0
    %699 = vmatpush2.msra.mxu0 %v416
    %700 = vmatprep.subr.mxu0 0.0
    %701 = vmatpush2.msra.mxu0 %v415
    %702 = vmatprep.subr.mxu0 0.0
    %703 = vmatpush2.msra.mxu0 %v414
    %704 = vmatprep.subr.mxu0 0.0
    %705 = vmatpush2.msra.mxu0 %v413
    %706 = vmatprep.subr.mxu0 0.0
    %707 = vmatpush2.msra.mxu0 %v412
    %708 = vmatprep.subr.mxu0 0.0
    %709 = vmatpush2.msra.mxu0 %v411
    %710 = vmatprep.subr.mxu0 0.0
    %711 = vmatpush2.msra.mxu0 %v410
    %712 = vmatprep.subr.mxu0 0.0
    %713 = vmatpush2.msra.mxu0 %v409
    %714 = vmatprep.subr.mxu0 0.0
    %715 = vmatpush2.msra.mxu0 %v408
    %716 = vmatprep.subr.mxu0 0.0
    %717 = vmatpush2.msra.mxu0 %v407
    %718 = vmatprep.mubr.f32.mxu0 %v284
    %719 = vmatmul.mubr.f32.gmra.mxu0 %v283
    %v720 = vpop.f32.mrf.mxu0
    %v721 = vadd.f32 %v652, %v720
    %v722 = vpop.f32.mrf.mxu0
    %723 = vdwg.mxu0
    %724 = vmatprep.subr.mxu0 0.0
    %725 = vmatpush1.msra.mxu0 %v438
    %726 = vmatprep.subr.mxu0 0.0
    %727 = vmatpush1.msra.mxu0 %v437
    %728 = vmatprep.subr.mxu0 0.0
    %729 = vmatpush1.msra.mxu0 %v436
    %730 = vmatprep.subr.mxu0 0.0
    %731 = vmatpush1.msra.mxu0 %v435
    %732 = vmatprep.subr.mxu0 0.0
    %733 = vmatpush1.msra.mxu0 %v434
    %734 = vmatprep.subr.mxu0 0.0
    %735 = vmatpush1.msra.mxu0 %v433
    %736 = vmatprep.subr.mxu0 0.0
    %737 = vmatpush1.msra.mxu0 %v432
    %738 = vmatprep.subr.mxu0 0.0
    %739 = vmatpush1.msra.mxu0 %v431
    %740 = vmatprep.subr.mxu0 0.0
    %741 = vmatpush1.msra.mxu0 %v430
    %742 = vmatprep.subr.mxu0 0.0
    %743 = vmatpush1.msra.mxu0 %v429
    %744 = vmatprep.subr.mxu0 0.0
    %745 = vmatpush1.msra.mxu0 %v428
    %746 = vmatprep.subr.mxu0 0.0
    %747 = vmatpush1.msra.mxu0 %v427
    %748 = vmatprep.subr.mxu0 0.0
    %749 = vmatpush1.msra.mxu0 %v426
    %750 = vmatprep.subr.mxu0 0.0
    %751 = vmatpush1.msra.mxu0 %v425
    %752 = vmatprep.subr.mxu0 0.0
    %753 = vmatpush1.msra.mxu0 %v424
    %754 = vmatprep.subr.mxu0 0.0
    %755 = vmatpush1.msra.mxu0 %v423
    %756 = vmatprep.subr.mxu0 0.0
    %757 = vmatpush2.msra.mxu0 %v454
    %758 = vmatprep.subr.mxu0 0.0
    %759 = vmatpush2.msra.mxu0 %v453
    %760 = vmatprep.subr.mxu0 0.0
    %761 = vmatpush2.msra.mxu0 %v452
    %762 = vmatprep.subr.mxu0 0.0
    %763 = vmatpush2.msra.mxu0 %v451
    %764 = vmatprep.subr.mxu0 0.0
    %765 = vmatpush2.msra.mxu0 %v450
    %766 = vmatprep.subr.mxu0 0.0
    %767 = vmatpush2.msra.mxu0 %v449
    %768 = vmatprep.subr.mxu0 0.0
    %769 = vmatpush2.msra.mxu0 %v448
    %770 = vmatprep.subr.mxu0 0.0
    %771 = vmatpush2.msra.mxu0 %v447
    %772 = vmatprep.subr.mxu0 0.0
    %773 = vmatpush2.msra.mxu0 %v446
    %774 = vmatprep.subr.mxu0 0.0
    %775 = vmatpush2.msra.mxu0 %v445
    %776 = vmatprep.subr.mxu0 0.0
    %777 = vmatpush2.msra.mxu0 %v444
    %778 = vmatprep.subr.mxu0 0.0
    %779 = vmatpush2.msra.mxu0 %v443
    %780 = vmatprep.subr.mxu0 0.0
    %781 = vmatpush2.msra.mxu0 %v442
    %782 = vmatprep.subr.mxu0 0.0
    %783 = vmatpush2.msra.mxu0 %v441
    %784 = vmatprep.subr.mxu0 0.0
    %785 = vmatpush2.msra.mxu0 %v440
    %786 = vmatprep.subr.mxu0 0.0
    %787 = vmatpush2.msra.mxu0 %v439
    %788 = vmatprep.mubr.f32.mxu0 %v286
    %789 = vmatmul.mubr.f32.gmra.mxu0 %v285
    %v790 = vpop.f32.mrf.mxu0
    %v791 = vadd.f32 %v721, %v790
    %v792 = vpop.f32.mrf.mxu0
    %793 = vdwg.mxu0
    %794 = vmatprep.subr.mxu0 0.0
    %795 = vmatpush1.msra.mxu0 %v470
    %796 = vmatprep.subr.mxu0 0.0
    %797 = vmatpush1.msra.mxu0 %v469
    %798 = vmatprep.subr.mxu0 0.0
    %799 = vmatpush1.msra.mxu0 %v468
    %800 = vmatprep.subr.mxu0 0.0
    %801 = vmatpush1.msra.mxu0 %v467
    %802 = vmatprep.subr.mxu0 0.0
    %803 = vmatpush1.msra.mxu0 %v466
    %804 = vmatprep.subr.mxu0 0.0
    %805 = vmatpush1.msra.mxu0 %v465
    %806 = vmatprep.subr.mxu0 0.0
    %807 = vmatpush1.msra.mxu0 %v464
    %808 = vmatprep.subr.mxu0 0.0
    %809 = vmatpush1.msra.mxu0 %v463
    %810 = vmatprep.subr.mxu0 0.0
    %811 = vmatpush1.msra.mxu0 %v462
    %812 = vmatprep.subr.mxu0 0.0
    %813 = vmatpush1.msra.mxu0 %v461
    %814 = vmatprep.subr.mxu0 0.0
    %815 = vmatpush1.msra.mxu0 %v460
    %816 = vmatprep.subr.mxu0 0.0
    %817 = vmatpush1.msra.mxu0 %v459
    %818 = vmatprep.subr.mxu0 0.0
    %819 = vmatpush1.msra.mxu0 %v458
    %820 = vmatprep.subr.mxu0 0.0
    %821 = vmatpush1.msra.mxu0 %v457
    %822 = vmatprep.subr.mxu0 0.0
    %823 = vmatpush1.msra.mxu0 %v456
    %824 = vmatprep.subr.mxu0 0.0
    %825 = vmatpush1.msra.mxu0 %v455
    %826 = vmatprep.subr.mxu0 0.0
    %827 = vmatpush2.msra.mxu0 %v486
    %828 = vmatprep.subr.mxu0 0.0
    %829 = vmatpush2.msra.mxu0 %v485
    %830 = vmatprep.subr.mxu0 0.0
    %831 = vmatpush2.msra.mxu0 %v484
    %832 = vmatprep.subr.mxu0 0.0
    %833 = vmatpush2.msra.mxu0 %v483
    %834 = vmatprep.subr.mxu0 0.0
    %835 = vmatpush2.msra.mxu0 %v482
    %836 = vmatprep.subr.mxu0 0.0
    %837 = vmatpush2.msra.mxu0 %v481
    %838 = vmatprep.subr.mxu0 0.0
    %839 = vmatpush2.msra.mxu0 %v480
    %840 = vmatprep.subr.mxu0 0.0
    %841 = vmatpush2.msra.mxu0 %v479
    %842 = vmatprep.subr.mxu0 0.0
    %843 = vmatpush2.msra.mxu0 %v478
    %844 = vmatprep.subr.mxu0 0.0
    %845 = vmatpush2.msra.mxu0 %v477
    %846 = vmatprep.subr.mxu0 0.0
    %847 = vmatpush2.msra.mxu0 %v476
    %848 = vmatprep.subr.mxu0 0.0
    %849 = vmatpush2.msra.mxu0 %v475
    %850 = vmatprep.subr.mxu0 0.0
    %851 = vmatpush2.msra.mxu0 %v474
    %852 = vmatprep.subr.mxu0 0.0
    %853 = vmatpush2.msra.mxu0 %v473
    %854 = vmatprep.subr.mxu0 0.0
    %855 = vmatpush2.msra.mxu0 %v472
    %856 = vmatprep.subr.mxu0 0.0
    %857 = vmatpush2.msra.mxu0 %v471
    %858 = vmatprep.mubr.f32.mxu0 %v288
    %859 = vmatmul.mubr.f32.gmra.mxu0 %v287
    %v860 = vpop.f32.mrf.mxu0
    %v861 = vadd.f32 %v791, %v860
    %v862 = vpop.f32.mrf.mxu0
    %863 = vdwg.mxu0
    %864 = vmatprep.subr.mxu0 0.0
    %865 = vmatpush1.msra.mxu0 %v502
    %866 = vmatprep.subr.mxu0 0.0
    %867 = vmatpush1.msra.mxu0 %v501
    %868 = vmatprep.subr.mxu0 0.0
    %869 = vmatpush1.msra.mxu0 %v500
    %870 = vmatprep.subr.mxu0 0.0
    %871 = vmatpush1.msra.mxu0 %v499
    %872 = vmatprep.subr.mxu0 0.0
    %873 = vmatpush1.msra.mxu0 %v498
    %874 = vmatprep.subr.mxu0 0.0
    %875 = vmatpush1.msra.mxu0 %v497
    %876 = vmatprep.subr.mxu0 0.0
    %877 = vmatpush1.msra.mxu0 %v496
    %878 = vmatprep.subr.mxu0 0.0
    %879 = vmatpush1.msra.mxu0 %v495
    %880 = vmatprep.subr.mxu0 0.0
    %881 = vmatpush1.msra.mxu0 %v494
    %882 = vmatprep.subr.mxu0 0.0
    %883 = vmatpush1.msra.mxu0 %v493
    %884 = vmatprep.subr.mxu0 0.0
    %885 = vmatpush1.msra.mxu0 %v492
    %886 = vmatprep.subr.mxu0 0.0
    %887 = vmatpush1.msra.mxu0 %v491
    %888 = vmatprep.subr.mxu0 0.0
    %889 = vmatpush1.msra.mxu0 %v490
    %890 = vmatprep.subr.mxu0 0.0
    %891 = vmatpush1.msra.mxu0 %v489
    %892 = vmatprep.subr.mxu0 0.0
    %893 = vmatpush1.msra.mxu0 %v488
    %894 = vmatprep.subr.mxu0 0.0
    %895 = vmatpush1.msra.mxu0 %v487
    %896 = vmatprep.subr.mxu0 0.0
    %897 = vmatpush2.msra.mxu0 %v518
    %898 = vmatprep.subr.mxu0 0.0
    %899 = vmatpush2.msra.mxu0 %v517
    %900 = vmatprep.subr.mxu0 0.0
    %901 = vmatpush2.msra.mxu0 %v516
    %902 = vmatprep.subr.mxu0 0.0
    %903 = vmatpush2.msra.mxu0 %v515
    %904 = vmatprep.subr.mxu0 0.0
    %905 = vmatpush2.msra.mxu0 %v514
    %906 = vmatprep.subr.mxu0 0.0
    %907 = vmatpush2.msra.mxu0 %v513
    %908 = vmatprep.subr.mxu0 0.0
    %909 = vmatpush2.msra.mxu0 %v512
    %910 = vmatprep.subr.mxu0 0.0
    %911 = vmatpush2.msra.mxu0 %v511
    %912 = vmatprep.subr.mxu0 0.0
    %913 = vmatpush2.msra.mxu0 %v510
    %914 = vmatprep.subr.mxu0 0.0
    %915 = vmatpush2.msra.mxu0 %v509
    %916 = vmatprep.subr.mxu0 0.0
    %917 = vmatpush2.msra.mxu0 %v508
    %918 = vmatprep.subr.mxu0 0.0
    %919 = vmatpush2.msra.mxu0 %v507
    %920 = vmatprep.subr.mxu0 0.0
    %921 = vmatpush2.msra.mxu0 %v506
    %922 = vmatprep.subr.mxu0 0.0
    %923 = vmatpush2.msra.mxu0 %v505
    %924 = vmatprep.subr.mxu0 0.0
    %925 = vmatpush2.msra.mxu0 %v504
    %926 = vmatprep.subr.mxu0 0.0
    %927 = vmatpush2.msra.mxu0 %v503
    %928 = vmatprep.mubr.f32.mxu0 %v290
    %929 = vmatmul.mubr.f32.gmra.mxu0 %v289
    %v930 = vpop.f32.mrf.mxu0
    %v931 = vadd.f32 %v861, %v930
    %v932 = vpop.f32.mrf.mxu0
    %933 = vdwg.mxu0
    %934 = vmatprep.subr.mxu0 0.0
    %935 = vmatpush1.msra.mxu0 %v534
    %936 = vmatprep.subr.mxu0 0.0
    %937 = vmatpush1.msra.mxu0 %v533
    %938 = vmatprep.subr.mxu0 0.0
    %939 = vmatpush1.msra.mxu0 %v532
    %940 = vmatprep.subr.mxu0 0.0
    %941 = vmatpush1.msra.mxu0 %v531
    %942 = vmatprep.subr.mxu0 0.0
    %943 = vmatpush1.msra.mxu0 %v530
    %944 = vmatprep.subr.mxu0 0.0
    %945 = vmatpush1.msra.mxu0 %v529
    %946 = vmatprep.subr.mxu0 0.0
    %947 = vmatpush1.msra.mxu0 %v528
    %948 = vmatprep.subr.mxu0 0.0
    %949 = vmatpush1.msra.mxu0 %v527
    %950 = vmatprep.subr.mxu0 0.0
    %951 = vmatpush1.msra.mxu0 %v526
    %952 = vmatprep.subr.mxu0 0.0
    %953 = vmatpush1.msra.mxu0 %v525
    %954 = vmatprep.subr.mxu0 0.0
    %955 = vmatpush1.msra.mxu0 %v524
    %956 = vmatprep.subr.mxu0 0.0
    %957 = vmatpush1.msra.mxu0 %v523
    %958 = vmatprep.subr.mxu0 0.0
    %959 = vmatpush1.msra.mxu0 %v522
    %960 = vmatprep.subr.mxu0 0.0
    %961 = vmatpush1.msra.mxu0 %v521
    %962 = vmatprep.subr.mxu0 0.0
    %963 = vmatpush1.msra.mxu0 %v520
    %964 = vmatprep.subr.mxu0 0.0
    %965 = vmatpush1.msra.mxu0 %v519
    %966 = vmatprep.subr.mxu0 0.0
    %967 = vmatpush2.msra.mxu0 %v550
    %968 = vmatprep.subr.mxu0 0.0
    %969 = vmatpush2.msra.mxu0 %v549
    %970 = vmatprep.subr.mxu0 0.0
    %971 = vmatpush2.msra.mxu0 %v548
    %972 = vmatprep.subr.mxu0 0.0
    %973 = vmatpush2.msra.mxu0 %v547
    %974 = vmatprep.subr.mxu0 0.0
    %975 = vmatpush2.msra.mxu0 %v546
    %976 = vmatprep.subr.mxu0 0.0
    %977 = vmatpush2.msra.mxu0 %v545
    %978 = vmatprep.subr.mxu0 0.0
    %979 = vmatpush2.msra.mxu0 %v544
    %980 = vmatprep.subr.mxu0 0.0
    %981 = vmatpush2.msra.mxu0 %v543
    %982 = vmatprep.subr.mxu0 0.0
    %983 = vmatpush2.msra.mxu0 %v542
    %984 = vmatprep.subr.mxu0 0.0
    %985 = vmatpush2.msra.mxu0 %v541
    %986 = vmatprep.subr.mxu0 0.0
    %987 = vmatpush2.msra.mxu0 %v540
    %988 = vmatprep.subr.mxu0 0.0
    %989 = vmatpush2.msra.mxu0 %v539
    %990 = vmatprep.subr.mxu0 0.0
    %991 = vmatpush2.msra.mxu0 %v538
    %992 = vmatprep.subr.mxu0 0.0
    %993 = vmatpush2.msra.mxu0 %v537
    %994 = vmatprep.subr.mxu0 0.0
    %995 = vmatpush2.msra.mxu0 %v536
    %996 = vmatprep.subr.mxu0 0.0
    %997 = vmatpush2.msra.mxu0 %v535
    %998 = vmatprep.mubr.f32.mxu0 %v292
    %999 = vmatmul.mubr.f32.gmra.mxu0 %v291
    %v1000 = vpop.f32.mrf.mxu0
    %v1001 = vadd.f32 %v931, %v1000
    %v1002 = vpop.f32.mrf.mxu0
    %1003 = vdwg.mxu0
    %1004 = vmatprep.subr.mxu0 0.0
    %1005 = vmatpush1.msra.mxu0 %v566
    %1006 = vmatprep.subr.mxu0 0.0
    %1007 = vmatpush1.msra.mxu0 %v565
    %1008 = vmatprep.subr.mxu0 0.0
    %1009 = vmatpush1.msra.mxu0 %v564
    %1010 = vmatprep.subr.mxu0 0.0
    %1011 = vmatpush1.msra.mxu0 %v563
    %1012 = vmatprep.subr.mxu0 0.0
    %1013 = vmatpush1.msra.mxu0 %v562
    %1014 = vmatprep.subr.mxu0 0.0
    %1015 = vmatpush1.msra.mxu0 %v561
    %1016 = vmatprep.subr.mxu0 0.0
    %1017 = vmatpush1.msra.mxu0 %v560
    %1018 = vmatprep.subr.mxu0 0.0
    %1019 = vmatpush1.msra.mxu0 %v559
    %1020 = vmatprep.subr.mxu0 0.0
    %1021 = vmatpush1.msra.mxu0 %v558
    %1022 = vmatprep.subr.mxu0 0.0
    %1023 = vmatpush1.msra.mxu0 %v557
    %1024 = vmatprep.subr.mxu0 0.0
    %1025 = vmatpush1.msra.mxu0 %v556
    %1026 = vmatprep.subr.mxu0 0.0
    %1027 = vmatpush1.msra.mxu0 %v555
    %1028 = vmatprep.subr.mxu0 0.0
    %1029 = vmatpush1.msra.mxu0 %v554
    %1030 = vmatprep.subr.mxu0 0.0
    %1031 = vmatpush1.msra.mxu0 %v553
    %1032 = vmatprep.subr.mxu0 0.0
    %1033 = vmatpush1.msra.mxu0 %v552
    %1034 = vmatprep.subr.mxu0 0.0
    %1035 = vmatpush1.msra.mxu0 %v551
    %1036 = vmatprep.subr.mxu0 0.0
    %1037 = vmatpush2.msra.mxu0 %v582
    %1038 = vmatprep.subr.mxu0 0.0
    %1039 = vmatpush2.msra.mxu0 %v581
    %1040 = vmatprep.subr.mxu0 0.0
    %1041 = vmatpush2.msra.mxu0 %v580
    %1042 = vmatprep.subr.mxu0 0.0
    %1043 = vmatpush2.msra.mxu0 %v579
    %1044 = vmatprep.subr.mxu0 0.0
    %1045 = vmatpush2.msra.mxu0 %v578
    %1046 = vmatprep.subr.mxu0 0.0
    %1047 = vmatpush2.msra.mxu0 %v577
    %1048 = vmatprep.subr.mxu0 0.0
    %1049 = vmatpush2.msra.mxu0 %v576
    %1050 = vmatprep.subr.mxu0 0.0
    %1051 = vmatpush2.msra.mxu0 %v575
    %1052 = vmatprep.subr.mxu0 0.0
    %1053 = vmatpush2.msra.mxu0 %v574
    %1054 = vmatprep.subr.mxu0 0.0
    %1055 = vmatpush2.msra.mxu0 %v573
    %1056 = vmatprep.subr.mxu0 0.0
    %1057 = vmatpush2.msra.mxu0 %v572
    %1058 = vmatprep.subr.mxu0 0.0
    %1059 = vmatpush2.msra.mxu0 %v571
    %1060 = vmatprep.subr.mxu0 0.0
    %1061 = vmatpush2.msra.mxu0 %v570
    %1062 = vmatprep.subr.mxu0 0.0
    %1063 = vmatpush2.msra.mxu0 %v569
    %1064 = vmatprep.subr.mxu0 0.0
    %1065 = vmatpush2.msra.mxu0 %v568
    %1066 = vmatprep.subr.mxu0 0.0
    %1067 = vmatpush2.msra.mxu0 %v567
    %1068 = vmatprep.mubr.f32.mxu0 %v294
    %1069 = vmatmul.mubr.f32.gmra.mxu0 %v293
    %v1070 = vpop.f32.mrf.mxu0
    %v1071 = vadd.f32 %v1001, %v1070
    %v1072 = vpop.f32.mrf.mxu0
    %1073 = vdwg.mxu0
    %1074 = vmatprep.subr.mxu0 0.0
    %1075 = vmatpush1.msra.mxu0 %v598
    %1076 = vmatprep.subr.mxu0 0.0
    %1077 = vmatpush1.msra.mxu0 %v597
    %1078 = vmatprep.subr.mxu0 0.0
    %1079 = vmatpush1.msra.mxu0 %v596
    %1080 = vmatprep.subr.mxu0 0.0
    %1081 = vmatpush1.msra.mxu0 %v595
    %1082 = vmatprep.subr.mxu0 0.0
    %1083 = vmatpush1.msra.mxu0 %v594
    %1084 = vmatprep.subr.mxu0 0.0
    %1085 = vmatpush1.msra.mxu0 %v593
    %1086 = vmatprep.subr.mxu0 0.0
    %1087 = vmatpush1.msra.mxu0 %v592
    %1088 = vmatprep.subr.mxu0 0.0
    %1089 = vmatpush1.msra.mxu0 %v591
    %1090 = vmatprep.subr.mxu0 0.0
    %1091 = vmatpush1.msra.mxu0 %v590
    %1092 = vmatprep.subr.mxu0 0.0
    %1093 = vmatpush1.msra.mxu0 %v589
    %1094 = vmatprep.subr.mxu0 0.0
    %1095 = vmatpush1.msra.mxu0 %v588
    %1096 = vmatprep.subr.mxu0 0.0
    %1097 = vmatpush1.msra.mxu0 %v587
    %1098 = vmatprep.subr.mxu0 0.0
    %1099 = vmatpush1.msra.mxu0 %v586
    %1100 = vmatprep.subr.mxu0 0.0
    %1101 = vmatpush1.msra.mxu0 %v585
    %1102 = vmatprep.subr.mxu0 0.0
    %1103 = vmatpush1.msra.mxu0 %v584
    %1104 = vmatprep.subr.mxu0 0.0
    %1105 = vmatpush1.msra.mxu0 %v583
    %1106 = vmatprep.subr.mxu0 0.0
    %1107 = vmatpush2.msra.mxu0 %v614
    %1108 = vmatprep.subr.mxu0 0.0
    %1109 = vmatpush2.msra.mxu0 %v613
    %1110 = vmatprep.subr.mxu0 0.0
    %1111 = vmatpush2.msra.mxu0 %v612
    %1112 = vmatprep.subr.mxu0 0.0
    %1113 = vmatpush2.msra.mxu0 %v611
    %1114 = vmatprep.subr.mxu0 0.0
    %1115 = vmatpush2.msra.mxu0 %v610
    %1116 = vmatprep.subr.mxu0 0.0
    %1117 = vmatpush2.msra.mxu0 %v609
    %1118 = vmatprep.subr.mxu0 0.0
    %1119 = vmatpush2.msra.mxu0 %v608
    %1120 = vmatprep.subr.mxu0 0.0
    %1121 = vmatpush2.msra.mxu0 %v607
    %1122 = vmatprep.subr.mxu0 0.0
    %1123 = vmatpush2.msra.mxu0 %v606
    %1124 = vmatprep.subr.mxu0 0.0
    %1125 = vmatpush2.msra.mxu0 %v605
    %1126 = vmatprep.subr.mxu0 0.0
    %1127 = vmatpush2.msra.mxu0 %v604
    %1128 = vmatprep.subr.mxu0 0.0
    %1129 = vmatpush2.msra.mxu0 %v603
    %1130 = vmatprep.subr.mxu0 0.0
    %1131 = vmatpush2.msra.mxu0 %v602
    %1132 = vmatprep.subr.mxu0 0.0
    %1133 = vmatpush2.msra.mxu0 %v601
    %1134 = vmatprep.subr.mxu0 0.0
    %1135 = vmatpush2.msra.mxu0 %v600
    %1136 = vmatprep.subr.mxu0 0.0
    %1137 = vmatpush2.msra.mxu0 %v599
    %1138 = vmatprep.mubr.f32.mxu0 %v296
    %1139 = vmatmul.mubr.f32.gmra.mxu0 %v295
    %v1140 = vpop.f32.mrf.mxu0
    %v1141 = vadd.f32 %v1071, %v1140
    %v1142 = vpop.f32.mrf.mxu0
    %1143 = vdwg.mxu0
    %1144 = vmatprep.subr.mxu0 0.0
    %1145 = vmatpush1.msra.mxu0 %v630
    %1146 = vmatprep.subr.mxu0 0.0
    %1147 = vmatpush1.msra.mxu0 %v629
    %1148 = vmatprep.subr.mxu0 0.0
    %1149 = vmatpush1.msra.mxu0 %v628
    %1150 = vmatprep.subr.mxu0 0.0
    %1151 = vmatpush1.msra.mxu0 %v627
    %1152 = vmatprep.subr.mxu0 0.0
    %1153 = vmatpush1.msra.mxu0 %v626
    %1154 = vmatprep.subr.mxu0 0.0
    %1155 = vmatpush1.msra.mxu0 %v625
    %1156 = vmatprep.subr.mxu0 0.0
    %1157 = vmatpush1.msra.mxu0 %v624
    %1158 = vmatprep.subr.mxu0 0.0
    %1159 = vmatpush1.msra.mxu0 %v623
    %1160 = vmatprep.subr.mxu0 0.0
    %1161 = vmatpush1.msra.mxu0 %v622
    %1162 = vmatprep.subr.mxu0 0.0
    %1163 = vmatpush1.msra.mxu0 %v621
    %1164 = vmatprep.subr.mxu0 0.0
    %1165 = vmatpush1.msra.mxu0 %v620
    %1166 = vmatprep.subr.mxu0 0.0
    %1167 = vmatpush1.msra.mxu0 %v619
    %1168 = vmatprep.subr.mxu0 0.0
    %1169 = vmatpush1.msra.mxu0 %v618
    %1170 = vmatprep.subr.mxu0 0.0
    %1171 = vmatpush1.msra.mxu0 %v617
    %1172 = vmatprep.subr.mxu0 0.0
    %1173 = vmatpush1.msra.mxu0 %v616
    %1174 = vmatprep.subr.mxu0 0.0
    %1175 = vmatpush1.msra.mxu0 %v615
    %1176 = vmatprep.subr.mxu0 0.0
    %1177 = vmatpush2.msra.mxu0 %v646
    %1178 = vmatprep.subr.mxu0 0.0
    %1179 = vmatpush2.msra.mxu0 %v645
    %1180 = vmatprep.subr.mxu0 0.0
    %1181 = vmatpush2.msra.mxu0 %v644
    %1182 = vmatprep.subr.mxu0 0.0
    %1183 = vmatpush2.msra.mxu0 %v643
    %1184 = vmatprep.subr.mxu0 0.0
    %1185 = vmatpush2.msra.mxu0 %v642
    %1186 = vmatprep.subr.mxu0 0.0
    %1187 = vmatpush2.msra.mxu0 %v641
    %1188 = vmatprep.subr.mxu0 0.0
    %1189 = vmatpush2.msra.mxu0 %v640
    %1190 = vmatprep.subr.mxu0 0.0
    %1191 = vmatpush2.msra.mxu0 %v639
    %1192 = vmatprep.subr.mxu0 0.0
    %1193 = vmatpush2.msra.mxu0 %v638
    %1194 = vmatprep.subr.mxu0 0.0
    %1195 = vmatpush2.msra.mxu0 %v637
    %1196 = vmatprep.subr.mxu0 0.0
    %1197 = vmatpush2.msra.mxu0 %v636
    %1198 = vmatprep.subr.mxu0 0.0
    %1199 = vmatpush2.msra.mxu0 %v635
    %1200 = vmatprep.subr.mxu0 0.0
    %1201 = vmatpush2.msra.mxu0 %v634
    %1202 = vmatprep.subr.mxu0 0.0
    %1203 = vmatpush2.msra.mxu0 %v633
    %1204 = vmatprep.subr.mxu0 0.0
    %1205 = vmatpush2.msra.mxu0 %v632
    %1206 = vmatprep.subr.mxu0 0.0
    %1207 = vmatpush2.msra.mxu0 %v631
    %1208 = vmatprep.mubr.f32.mxu0 %v298
    %1209 = vmatmul.mubr.f32.gmra.mxu0 %v297
    %v1210 = vpop.f32.mrf.mxu0
    %v1211 = vadd.f32 %v1141, %v1210
    %v1212 = vpop.f32.mrf.mxu0
    %1213 = vdwg.mxu0
    %vm1214 = vcmask 123904
    %1215 = vst.msk [vmem:[#allocation2] sm:$0x3] %vm1214, %v1211
    // Predicated region
    $region22: #{_fused_forward.1} parent=1 // pred_check
      _
    $region23: #{_fused_forward.1} parent=1 // pred_check_branch
      %1217 = sbr.rel (0) target = $region25
    $region24: #{_fused_forward.1} parent=1 // pred_region
      _
    $region25: #{_fused_forward.1} parent=1 // pred_fallthru
      _
    // Predicated region
    $region26: #{_fused_forward.1} parent=1 // pred_check
      _
    $region27: #{_fused_forward.1} parent=1 // pred_check_branch
      %1219 = sbr.rel (0) target = $region29
    $region28: #{_fused_forward.1} parent=1 // pred_region
      _
    $region29: #{_fused_forward.1} parent=1 // pred_fallthru
      _
    // Predicated region
    $region30: #{_fused_forward.1} parent=1 // pred_check
      _
    $region31: #{_fused_forward.1} parent=1 // pred_check_branch
      %1221 = sbr.rel (0) target = $region33
    $region32: #{_fused_forward.1} parent=1 // pred_region
      %s1223 = ssub.s32 32, 32
      %1224 = vsyncadd [#allocation3], %s1223
      %s1226 = sshll.u32 [#allocation2], 4
      %s1227 = int_to_ptr.vmem [resolvable:$true] %s1226
      %1229 = dma.vmem_to_hbm [thread:$0]  %s1227, 32, %s7, [#allocation3]
    $region33: #{_fused_forward.1} parent=1 // pred_fallthru
      _
    // Predicated region
    $region34: #{_fused_forward.1} parent=1 // pred_check
      _
    $region35: #{_fused_forward.1} parent=1 // pred_check_branch
      %1231 = sbr.rel (0) target = $region37
    $region36: #{_fused_forward.1} parent=1 // pred_region
      _
    $region37: #{_fused_forward.1} parent=1 // pred_fallthru
      _
    // Predicated region
    $region38: #{_fused_forward.1} parent=1 // pred_check
      _
    $region39: #{_fused_forward.1} parent=1 // pred_check_branch
      %1233 = sbr.rel (0) target = $region41
    $region40: #{_fused_forward.1} parent=1 // pred_region
      _
    $region41: #{_fused_forward.1} parent=1 // pred_fallthru
      _
    // Predicated region
    $region42: #{_fused_forward.1} parent=1 // pred_check
      _
    $region43: #{_fused_forward.1} parent=1 // pred_check_branch
      %1235 = sbr.rel (0) target = $region45
    $region44: #{_fused_forward.1} parent=1 // pred_region
      %1236 = dma.done [#allocation3], 32
    $region45: #{_fused_forward.1} parent=1 // pred_fallthru
      _
    %1237 = vsyncpa [#allocation3], 1

</llo_original>
